<compile_context>
chip_gen: v7x
topology: tpu7x:2x2x1
jax: 0.10.0
libtpu: 0.0.40
codegen_flags: <defaults>
</compile_context>

<pallas_src>
import functools

import jax
import jax.numpy as jnp
from jax import lax
from jax.experimental import pallas as pl
from jax.experimental.pallas import tpu as pltpu

_EPS = 1e-6                       # F.gaussian_nll_loss default eps
_TILE_HW_CAP = 131072             # lanes per HW tile (f32 dbl-buffered ~18 MiB)
_VMEM_LIMIT = 32 * 1024 * 1024    # safe on v5e/v6e (128 MiB) and v7x (64 MiB)


def _nll_kernel(fg_ref, xhat_ref, x_ref, mask_ref, out_ref, *,
                bg_var, hw, tile_hw, group, rows, n_tps, n_t_total, ragged):
    ti = pl.program_id(2)

    @pl.when(ti == 0)
    def _init():
        out_ref[...] = jnp.zeros_like(out_ref)

    fg = fg_ref[0]                                    # (rows, 1) per-(batch,chan) fg_var
    m = mask_ref[0].astype(jnp.float32)               # (group, TILE), native dtype -> f32 in-reg

    # Expand each batch's single mask row over its 4 channels, in-register
    # (broadcast + select only — no duplicated mask stream from HBM).
    if group == 1:
        m_full = jnp.broadcast_to(m, (rows, tile_hw))
    else:  # group == 2: rows 0..3 use mask row 0, rows 4..7 use mask row 1
        row_id = lax.broadcasted_iota(jnp.int32, (rows, tile_hw), 0)
        m_full = jnp.where(row_id < 4,
                           jnp.broadcast_to(m[0:1, :], (rows, tile_hw)),
                           jnp.broadcast_to(m[1:2, :], (rows, tile_hw)))

    diff = xhat_ref[0].astype(jnp.float32) - x_ref[0].astype(jnp.float32)   # (rows, TILE)

    # var = (mask == 0) * bg_var + mask * fg_var  (handles soft masks exactly
    # like the PyTorch reference), then the gaussian_nll_loss eps clamp.
    var = (m_full == 0).astype(jnp.float32) * bg_var + m_full * fg
    var = jnp.maximum(var, _EPS)

    # full=False Gaussian NLL.  Exact division -> matches the XLA reference.
    nll = 0.5 * (jnp.log(var) + diff * diff / var)

    if not ragged:
        out_ref[...] += jnp.sum(nll)
    else:
        s = pl.program_id(1)
        is_last = (s * n_tps + ti) == (n_t_total - 1)   # global last HW tile

        @pl.when(jnp.logical_not(is_last))
        def _interior():                                 # no masking cost here
            out_ref[...] += jnp.sum(nll)

        @pl.when(is_last)
        def _tail():                                     # discard ragged columns
            valid = hw - (n_t_total - 1) * tile_hw       # static python int
            col = lax.broadcasted_iota(jnp.int32, (rows, tile_hw), 1)
            out_ref[...] += jnp.sum(jnp.where(col < valid, nll, 0.0))


def gaussian_regression_loss(latent, x_hat, x, mask, w, b, bg_var=1.0,
                             tile_hw_cap=_TILE_HW_CAP):
    """latent (B, 2*input_dim); x_hat, x (B, 4, H, W) NCHW; mask (B, 1, H, W)."""
    B, C, H, W = x_hat.shape
    assert C == 4, "fc projects latent to 4 per-channel variances"
    HW = H * W

    # fg_var = exp(fc(latent)): tiny (B, 4) op, hoisted out of the kernel.
    fg_var = jnp.exp(
        jnp.asarray(latent, jnp.float32) @ jnp.asarray(w, jnp.float32).T
        + jnp.asarray(b, jnp.float32))

    # Pack two batches per block when B is even so the second-minor (sublane)
    # dim is 8 instead of 4 -> full f32 vregs.  All reshapes below are free
    # (contiguous NCHW memory); mask keeps its native dtype.
    group = 2 if B % 2 == 0 else 1
    rows = 4 * group
    n_groups = B // group

    fg_col = fg_var.reshape(n_groups, rows, 1)
    xh = x_hat.reshape(n_groups, rows, HW)        # native dtype (bf16 welcome)
    xx = x.reshape(n_groups, rows, HW)
    mm = mask.reshape(n_groups, group, HW)        # native dtype, no f32 copy

    # Lane tiling: multiple of 128, capped for VMEM headroom on all gens.
    hw_128 = ((HW + 127) // 128) * 128
    tile_hw = min(hw_128, tile_hw_cap)
    n_t_total = pl.cdiv(HW, tile_hw)              # NO wrapper-side padding
    ragged = (HW % tile_hw) != 0

    # Extra parallel axis over contiguous halves of the HW tiles (when it
    # divides evenly) so both v7x TensorCores get work even for tiny B.
    n_split = 2 if (n_t_total % 2 == 0) else 1
    n_tps = n_t_total // n_split

    kernel = functools.partial(
        _nll_kernel, bg_var=float(bg_var), hw=HW, tile_hw=tile_hw,
        group=group, rows=rows, n_tps=n_tps, n_t_total=n_t_total, ragged=ragged)

    col_idx = lambda bi, s, ti: (bi, 0, s * n_tps + ti)

    partials = pl.pallas_call(
        kernel,
        out_shape=jax.ShapeDtypeStruct((n_groups * n_split, 1, 1), jnp.float32),
        grid=(n_groups, n_split, n_tps),
        in_specs=[
            pl.BlockSpec((1, rows, 1), lambda bi, s, ti: (bi, 0, 0)),   # fg_var cols
            pl.BlockSpec((1, rows, tile_hw), col_idx),                  # x_hat tile
            pl.BlockSpec((1, rows, tile_hw), col_idx),                  # x tile
            pl.BlockSpec((1, group, tile_hw), col_idx),                 # mask tile
        ],
        out_specs=pl.BlockSpec((1, 1, 1),
                               lambda bi, s, ti: (bi * n_split + s, 0, 0)),
        compiler_params=pltpu.CompilerParams(
            dimension_semantics=("parallel", "parallel", "arbitrary"),
            vmem_limit_bytes=_VMEM_LIMIT),
    )(fg_col, xh, xx, mm)

    # mean over batch of per-batch sums == total sum / B
    return jnp.sum(partials) / B


def _reference(latent, x_hat, x, mask, w, b, bg_var=1.0):
    # Pure-JAX replica of the PyTorch forward (reduction='none' inside the NLL).
    fg_var = jnp.exp(jnp.asarray(latent, jnp.float32) @ jnp.asarray(w, jnp.float32).T
                     + jnp.asarray(b, jnp.float32))                    # (B, 4)
    mask4 = jnp.broadcast_to(mask.astype(jnp.float32), x_hat.shape)    # repeat(1,4,1,1)
    fg = fg_var.reshape(-1, 4, 1, 1)
    var = (mask4 == 0).astype(jnp.float32) * bg_var + mask4 * fg
    var = jnp.maximum(var, _EPS)
    diff = x_hat.astype(jnp.float32) - x.astype(jnp.float32)
    nll = 0.5 * (jnp.log(var) + diff * diff / var)
    return jnp.mean(jnp.sum(nll.reshape(x.shape[0], -1), axis=1))


if __name__ == "__main__":
    def _make(key, B, H, W, input_dim=32):
        fan_in = input_dim * 2
        k1, k2, k3, k4, k5, k6 = jax.random.split(key, 6)
        latent = jax.random.normal(k1, (B, fan_in), jnp.float32)
        x_hat = jax.random.normal(k2, (B, 4, H, W), jnp.float32)
        x = jax.random.normal(k3, (B, 4, H, W), jnp.float32)
        mask = jax.random.bernoulli(k4, 0.5, (B, 1, H, W)).astype(jnp.float32)
        # Deterministic nn.Linear(input_dim*2, 4)-style init.
        bound = 1.0 / (fan_in ** 0.5)
        w = jax.random.uniform(k5, (4, fan_in), jnp.float32, -bound, bound)
        b = jax.random.uniform(k6, (4,), jnp.float32, -bound, bound)
        return latent, x_hat, x, mask, w, b

    def _check(args, bg_var, **kw):
        out = jax.block_until_ready(gaussian_regression_loss(*args, bg_var=bg_var, **kw))
        ref = _reference(*args, bg_var=bg_var)
        rel = abs(float(out) - float(ref)) / max(1.0, abs(float(ref)))
        assert rel <= 1e-4, (float(out), float(ref), rel)

    keys = jax.random.split(jax.random.PRNGKey(0), 3)

    # Case 1: primary small shape (B=2, 4, 16, 16) — packed 8-sublane path.
    _check(_make(keys[0], 2, 16, 16), bg_var=1.0)

    # Case 2: force multi-tile + split parallel axis + ragged last tile
    # (HW=400 -> 4 tiles of 128, n_split=2), still packed 8-sublane.
    _check(_make(keys[1], 2, 20, 20), bg_var=0.5, tile_hw_cap=128)

    # Case 3: odd batch -> 4-sublane fallback, odd tile count, ragged tail
    # (HW=324 -> 3 tiles of 128).
    _check(_make(keys[2], 1, 18, 18), bg_var=2.0, tile_hw_cap=128)

    print("KERNEL_OK")
</pallas_src>

<mosaic_0001>
module attributes {stable_mosaic.version = 11 : i64} {
  func.func @_nll_kernel(%arg0: i32, %arg1: i32, %arg2: i32, %arg3: memref<1x8x1xf32, #tpu.memory_space<vmem>>, %arg4: memref<1x8x256xf32, #tpu.memory_space<vmem>>, %arg5: memref<1x8x256xf32, #tpu.memory_space<vmem>>, %arg6: memref<1x2x256xf32, #tpu.memory_space<vmem>>, %arg7: memref<1x1x1xf32, #tpu.memory_space<vmem>>) attributes {dimension_semantics = [#tpu.dimension_semantics<parallel>, #tpu.dimension_semantics<parallel>, #tpu.dimension_semantics<arbitrary>], iteration_bounds = array<i64: 1, 1, 1>, scalar_prefetch = 0 : i64, scratch_operands = 0 : i64, tpu.core_type = #tpu.core_type<tc>, window_params = [{transform_indices = @transform_0, window_bounds = array<i64: 1, 8, 1>}, {transform_indices = @transform_1, window_bounds = array<i64: 1, 8, 256>}, {transform_indices = @transform_2, window_bounds = array<i64: 1, 8, 256>}, {transform_indices = @transform_3, window_bounds = array<i64: 1, 2, 256>}, {transform_indices = @transform_4, window_bounds = array<i64: 1, 1, 1>}]} {
    %c0_i32 = arith.constant 0 : i32
    %0 = arith.cmpi eq, %arg2, %c0_i32 : i32
    %1 = arith.extui %0 : i1 to i32
    %c0_i32_0 = arith.constant 0 : i32
    %2 = arith.cmpi ne, %1, %c0_i32_0 : i32
    scf.if %2 {
      %cst_22 = arith.constant 0.000000e+00 : f32
      %47 = vector.broadcast %cst_22 : f32 to vector<1x1x1xf32>
      %c0_23 = arith.constant 0 : index
      %c0_24 = arith.constant 0 : index
      %c0_25 = arith.constant 0 : index
      %48 = vector.load %arg7[%c0_23, %c0_24, %c0_25] : memref<1x1x1xf32, #tpu.memory_space<vmem>>, vector<1x1x1xf32>
      tpu.vector_store %arg7[%c0_23, %c0_24, %c0_25], %47 {strides = array<i32>} : memref<1x1x1xf32, #tpu.memory_space<vmem>>, vector<1x1x1xf32>,
    } else {
    }
    %c0 = arith.constant 0 : index
    %c0_1 = arith.constant 0 : index
    %c0_2 = arith.constant 0 : index
    %3 = vector.load %arg3[%c0, %c0_1, %c0_2] : memref<1x8x1xf32, #tpu.memory_space<vmem>>, vector<1x8x1xf32>
    %4 = vector.shape_cast %3 : vector<1x8x1xf32> to vector<8x1xf32>
    %c0_3 = arith.constant 0 : index
    %c0_4 = arith.constant 0 : index
    %c0_5 = arith.constant 0 : index
    %5 = vector.load %arg6[%c0_3, %c0_4, %c0_5] : memref<1x2x256xf32, #tpu.memory_space<vmem>>, vector<1x2x256xf32>
    %6 = vector.shape_cast %5 : vector<1x2x256xf32> to vector<2x256xf32>
    %7 = tpu.iota {dimensions = array<i32: 0>} : vector<8x256xi32>
    %c4_i32 = arith.constant 4 : i32
    %8 = vector.broadcast %c4_i32 : i32 to vector<8x256xi32>
    %9 = arith.cmpi slt, %7, %8 : vector<8x256xi32>
    %10 = vector.extract_strided_slice %6 {offsets = [0, 0], sizes = [1, 256], strides = [1, 1]} : vector<2x256xf32> to vector<1x256xf32>
    %11 = vector.shape_cast %10 : vector<1x256xf32> to vector<1x256xf32>
    %12 = vector.broadcast %11 : vector<1x256xf32> to vector<8x256xf32>
    %13 = vector.extract_strided_slice %6 {offsets = [1, 0], sizes = [1, 256], strides = [1, 1]} : vector<2x256xf32> to vector<1x256xf32>
    %14 = vector.shape_cast %13 : vector<1x256xf32> to vector<1x256xf32>
    %15 = vector.broadcast %14 : vector<1x256xf32> to vector<8x256xf32>
    %16 = arith.select %9, %12, %15 : vector<8x256xi1>, vector<8x256xf32>
    %c0_6 = arith.constant 0 : index
    %c0_7 = arith.constant 0 : index
    %c0_8 = arith.constant 0 : index
    %17 = vector.load %arg4[%c0_6, %c0_7, %c0_8] : memref<1x8x256xf32, #tpu.memory_space<vmem>>, vector<1x8x256xf32>
    %18 = vector.shape_cast %17 : vector<1x8x256xf32> to vector<8x256xf32>
    %c0_9 = arith.constant 0 : index
    %c0_10 = arith.constant 0 : index
    %c0_11 = arith.constant 0 : index
    %19 = vector.load %arg5[%c0_9, %c0_10, %c0_11] : memref<1x8x256xf32, #tpu.memory_space<vmem>>, vector<1x8x256xf32>
    %20 = vector.shape_cast %19 : vector<1x8x256xf32> to vector<8x256xf32>
    %21 = arith.subf %18, %20 : vector<8x256xf32>
    %cst = arith.constant 0.000000e+00 : f32
    %22 = vector.broadcast %cst : f32 to vector<8x256xf32>
    %23 = arith.cmpf oeq, %16, %22 : vector<8x256xf32>
    %24 = arith.extui %23 : vector<8x256xi1> to vector<8x256xi32>
    %25 = arith.sitofp %24 : vector<8x256xi32> to vector<8x256xf32>
    %cst_12 = arith.constant 1.000000e+00 : f32
    %26 = vector.broadcast %cst_12 : f32 to vector<8x256xf32>
    %27 = arith.mulf %25, %26 : vector<8x256xf32>
    %28 = vector.broadcast %4 : vector<8x1xf32> to vector<8x256xf32>
    %29 = arith.mulf %16, %28 : vector<8x256xf32>
    %30 = arith.addf %27, %29 : vector<8x256xf32>
    %cst_13 = arith.constant 9.99999997E-7 : f32
    %31 = vector.broadcast %cst_13 : f32 to vector<8x256xf32>
    %32 = arith.maximumf %30, %31 : vector<8x256xf32>
    %33 = math.log %32 : vector<8x256xf32>
    %34 = arith.mulf %21, %21 : vector<8x256xf32>
    %35 = arith.divf %34, %32 : vector<8x256xf32>
    %36 = arith.addf %33, %35 : vector<8x256xf32>
    %cst_14 = arith.constant 5.000000e-01 : f32
    %37 = vector.broadcast %cst_14 : f32 to vector<8x256xf32>
    %38 = arith.mulf %37, %36 : vector<8x256xf32>
    %c0_15 = arith.constant 0 : index
    %c0_16 = arith.constant 0 : index
    %c0_17 = arith.constant 0 : index
    %39 = vector.load %arg7[%c0_15, %c0_16, %c0_17] : memref<1x1x1xf32, #tpu.memory_space<vmem>>, vector<1x1x1xf32>
    %40 = vector.shape_cast %38 : vector<8x256xf32> to vector<1x8x256xf32>
    %cst_18 = arith.constant dense<0.000000e+00> : vector<1xf32>
    %41 = vector.multi_reduction <add>, %40, %cst_18 [1, 2] : vector<1x8x256xf32> to vector<1xf32>
    %42 = vector.shape_cast %41 : vector<1xf32> to vector<1x1x1xf32>
    %43 = vector.extract %42[0, 0, 0] : f32 from vector<1x1x1xf32>
    %44 = vector.broadcast %43 : f32 to vector<1x1x1xf32>
    %45 = arith.addf %39, %44 : vector<1x1x1xf32>
    %c0_19 = arith.constant 0 : index
    %c0_20 = arith.constant 0 : index
    %c0_21 = arith.constant 0 : index
    %46 = vector.load %arg7[%c0_19, %c0_20, %c0_21] : memref<1x1x1xf32, #tpu.memory_space<vmem>>, vector<1x1x1xf32>
    tpu.vector_store %arg7[%c0_19, %c0_20, %c0_21], %45 {strides = array<i32>} : memref<1x1x1xf32, #tpu.memory_space<vmem>>, vector<1x1x1xf32>,
    return
  }
  func.func @transform_0(%arg0: i32, %arg1: i32, %arg2: i32) -> (i32, i32, i32) {
    %c0_i32 = arith.constant 0 : i32
    %c0_i32_0 = arith.constant 0 : i32
    %c0_i32_1 = arith.constant 0 : i32
    return %arg0, %c0_i32, %c0_i32_0 : i32, i32, i32
  }
  func.func @transform_1(%arg0: i32, %arg1: i32, %arg2: i32) -> (i32, i32, i32) {
    %c1_i32 = arith.constant 1 : i32
    %0 = arith.muli %arg1, %c1_i32 : i32
    %1 = arith.addi %0, %arg2 : i32
    %c0_i32 = arith.constant 0 : i32
    %c0_i32_0 = arith.constant 0 : i32
    return %arg0, %c0_i32, %1 : i32, i32, i32
  }
  func.func @transform_2(%arg0: i32, %arg1: i32, %arg2: i32) -> (i32, i32, i32) {
    %c1_i32 = arith.constant 1 : i32
    %0 = arith.muli %arg1, %c1_i32 : i32
    %1 = arith.addi %0, %arg2 : i32
    %c0_i32 = arith.constant 0 : i32
    %c0_i32_0 = arith.constant 0 : i32
    return %arg0, %c0_i32, %1 : i32, i32, i32
  }
  func.func @transform_3(%arg0: i32, %arg1: i32, %arg2: i32) -> (i32, i32, i32) {
    %c1_i32 = arith.constant 1 : i32
    %0 = arith.muli %arg1, %c1_i32 : i32
    %1 = arith.addi %0, %arg2 : i32
    %c0_i32 = arith.constant 0 : i32
    %c0_i32_0 = arith.constant 0 : i32
    return %arg0, %c0_i32, %1 : i32, i32, i32
  }
  func.func @transform_4(%arg0: i32, %arg1: i32, %arg2: i32) -> (i32, i32, i32) {
    %c1_i32 = arith.constant 1 : i32
    %0 = arith.muli %arg0, %c1_i32 : i32
    %1 = arith.addi %0, %arg1 : i32
    %c0_i32 = arith.constant 0 : i32
    %c0_i32_0 = arith.constant 0 : i32
    %c0_i32_1 = arith.constant 0 : i32
    return %1, %c0_i32, %c0_i32_0 : i32, i32, i32
  }
}

</mosaic_0001>

<llo_original>
// kernel: tpu_custom_call.1
$region0: #{tpu_custom_call.1}
  #allocation0 [shape = 'u32[]', space=smem, size = 0x4, offset = 0x4, fixed_abs, tag = 'smem constant byte address 0x4 - core index']
  #allocation1 [shape = 'u32[144,128]{1,0:T(1,128)}', space=vmem, size = 0x12000, scoped, tag = 'internal scratch']
  %s0 = inlined_call_operand.vmem [shape: f32[1,8,1], index: 0, kind: input, shape index: {}]
  %s1 = inlined_call_operand.hbm [shape: f32[1,8,256], index: 1, kind: input, shape index: {}]
  %s2 = inlined_call_operand.vmem [shape: f32[1,8,256], index: 2, kind: input, shape index: {}]
  %s3 = inlined_call_operand.vmem [shape: f32[1,2,256], index: 3, kind: input, shape index: {}]
  %s4 = inlined_call_operand.hbm [shape: f32[1,1,1], index: 4, kind: output, shape index: {}]
  %s5 = sld [smem:[#allocation0]]
  $region34: #{tpu_custom_call.1} parent=0
    _
  %s7 = ssub.s32 1, %s5
  %s8 = scalar_select 0, %s7, %s5
  $region1: #{tpu_custom_call.1} parent=0
    #allocation2 [shape = 'u8[8192]{0}', space=vmem, size = 0x2000, scoped, tag = 'input window, operand 1, single buffered']
    #allocation3 [shape = 's32[1]{0}', space=sflag, size = 0x4, scoped, tag = 'scoped memory for tpu_custom_call.1']
    #allocation4 [shape = 's32[1]{0}', space=sflag, size = 0x4, scoped, tag = 'scoped memory for tpu_custom_call.1']
    #allocation5 [shape = 'u8[512]{0}', space=vmem, size = 0x400, scoped, tag = 'output window, operand 0, single buffered']
    %9 = vsyncpa [#allocation3], 0
    %10 = vsyncpa [#allocation4], 0
    // Predicated region
    $region2: #{tpu_custom_call.1} parent=1 // pred_check
      _
    $region3: #{tpu_custom_call.1} parent=1 // pred_check_branch
      %12 = sbr.rel (0) target = $region5
    $region4: #{tpu_custom_call.1} parent=1 // pred_region
      _
    $region5: #{tpu_custom_call.1} parent=1 // pred_fallthru
      _
    // Predicated region
    $region6: #{tpu_custom_call.1} parent=1 // pred_check
      _
    $region7: #{tpu_custom_call.1} parent=1 // pred_check_branch
      %14 = sbr.rel (0) target = $region9
    $region8: #{tpu_custom_call.1} parent=1 // pred_region
      %s15 = sadd.s32 0, 0
      %s16 = smul.u32 2, %s15
      %s18 = ssub.s32 256, 256
      %19 = vsyncadd [#allocation3], %s18
      %s20 = smul.addr %s16, 128
      %s21 = scalar_lea.hbm %s1, %s20
      %s23 = sshll.u32 [#allocation2], 4
      %s24 = int_to_ptr.vmem [resolvable:$true] %s23
      %26 = dma.hbm_to_vmem [thread:$0]  %s21, 256, %s24, [#allocation3]
    $region9: #{tpu_custom_call.1} parent=1 // pred_fallthru
      _
    // Predicated region
    $region10: #{tpu_custom_call.1} parent=1 // pred_check
      _
    $region11: #{tpu_custom_call.1} parent=1 // pred_check_branch
      %28 = sbr.rel (0) target = $region13
    $region12: #{tpu_custom_call.1} parent=1 // pred_region
      %s29 = sadd.s32 0, 0
      %s30 = smul.u32 2, %s29
      %p31 = scmp.lt.s32.totalorder %s30, 1
      %s32 = scalar_select %p31, %s30, 1
      %s33 = smul.addr %s32, 8
      %s34 = scalar_lea.vmem %s2, %s33
      %s35 = sadd.s32 0, 0
      %s36 = smul.u32 2, %s35
    $region13: #{tpu_custom_call.1} parent=1 // pred_fallthru
      _
    // Predicated region
    $region14: #{tpu_custom_call.1} parent=1 // pred_check
      _
    $region15: #{tpu_custom_call.1} parent=1 // pred_check_branch
      %38 = sbr.rel (0) target = $region17
    $region16: #{tpu_custom_call.1} parent=1 // pred_region
      %s39 = sadd.s32 0, 0
      %s40 = smul.u32 2, %s39
      %p41 = scmp.lt.s32.totalorder %s40, 1
      %s42 = scalar_select %p41, %s40, 1
      %s43 = smul.addr %s42, 2
      %s44 = scalar_lea.vmem %s3, %s43
      %s45 = sadd.s32 0, 0
      %s46 = smul.u32 2, %s45
    $region17: #{tpu_custom_call.1} parent=1 // pred_fallthru
      _
    // Predicated region
    $region18: #{tpu_custom_call.1} parent=1 // pred_check
      _
    $region19: #{tpu_custom_call.1} parent=1 // pred_check_branch
      %48 = sbr.rel (0) target = $region21
    $region20: #{tpu_custom_call.1} parent=1 // pred_region
      %49 = dma.done [#allocation3], 256
    $region21: #{tpu_custom_call.1} parent=1 // pred_fallthru
      _
    %s50 = sadd.s32 0, 0
    %s51 = smul.u32 2, %s50
    %p52 = scmp.lt.s32.totalorder %s51, 1
    %s53 = scalar_select %p52, %s51, 1
    %s54 = smul.addr %s53, 8
    %s55 = scalar_lea.vmem %s2, %s54
    %s56 = sadd.s32 0, 0
    %s57 = smul.u32 2, %s56
    %p58 = scmp.lt.s32.totalorder %s57, 1
    %s59 = scalar_select %p58, %s57, 1
    %s60 = smul.addr %s59, 2
    %s61 = scalar_lea.vmem %s3, %s60
    %s62 = sadd.s32 0, 0
    %s63 = smul.u32 2, %s62
    %s64 = sadd.s32 0, 0
    %s65 = smul.u32 2, %s64
    %p66 = scmp.lt.s32.totalorder %s65, 1
    %s67 = scalar_select %p66, %s65, 1
    %s68 = smul.addr %s67, 8
    %s69 = scalar_lea.vmem %s2, %s68
    %s70 = sadd.s32 0, 0
    %s71 = smul.u32 2, %s70
    %s72 = sadd.s32 0, 0
    %s73 = smul.u32 2, %s72
    %p74 = scmp.lt.s32.totalorder %s73, 1
    %s75 = scalar_select %p74, %s73, 1
    %s76 = smul.addr %s75, 2
    %s77 = scalar_lea.vmem %s3, %s76
    %s78 = sadd.s32 0, 0
    %s79 = smul.u32 2, %s78
    %s80 = sadd.s32 0, 0
    %p81 = scmp.eq.s32.totalorder 0, 0
    // Predicated region
    $region22: #{tpu_custom_call.1} parent=1 // pred_check
      %p82 = pneg %p81
    $region23: #{tpu_custom_call.1} parent=1 // pred_check_branch
      %84 = sbr.rel (%p82) target = $region25
    $region24: #{tpu_custom_call.1} parent=1 // pred_region
      %vm85 = vcmask 0
      %86 = vst.msk [vmem:[#allocation5] sm:$0x1] %vm85, 0.0
    $region25: #{tpu_custom_call.1} parent=1 // pred_fallthru
      _
    %v87 = vld [vmem:[%s0] sm:$0xff]
    %v88 = vld [vmem:[%s77] sm:$0xf]
    %v89 = vlaneseq
    %v90 = vshrl.u32 %v89, 7
    %vm91 = vcmp.lt.s32.totalorder %v90, 4
    %v93 = vlaneseq
    %v94 = vshrl.u32 %v93, 7
    %v95 = vsub.s32 0, %v94
    %v96 = vrot.slane %v88, %v95
    %v97 = vlaneseq
    %v98 = vshrl.u32 %v97, 7
    %v99 = vsub.s32 2, %v98
    %v100 = vrot.slane %v88, %v99
    %v103 = vlaneseq
    %v104 = vshrl.u32 %v103, 7
    %v105 = vsub.s32 0, %v104
    %v106 = vrot.slane %v96, %v105
    %v107 = vlaneseq
    %v108 = vshrl.u32 %v107, 7
    %v109 = vsub.s32 0, %v108
    %v110 = vrot.slane %v100, %v109
    %v111 = vlaneseq
    %v112 = vshrl.u32 %v111, 7
    %v113 = vsub.s32 1, %v112
    %v114 = vrot.slane %v88, %v113
    %v115 = vlaneseq
    %v116 = vshrl.u32 %v115, 7
    %v117 = vsub.s32 3, %v116
    %v118 = vrot.slane %v88, %v117
    %v121 = vlaneseq
    %v122 = vshrl.u32 %v121, 7
    %v123 = vsub.s32 1, %v122
    %v124 = vrot.slane %v114, %v123
    %v125 = vlaneseq
    %v126 = vshrl.u32 %v125, 7
    %v127 = vsub.s32 1, %v126
    %v128 = vrot.slane %v118, %v127
    %v129 = vsel %vm91, %v106, %v124
    %v130 = vsel %vm91, %v110, %v128
    %v131 = vld [vmem:[#allocation2] sm:$0xff]
    %v132 = vld [vmem:[#allocation2 + $0x8] sm:$0xff]
    %v133 = vld [vmem:[%s69] sm:$0xff]
    %v134 = vld [vmem:[%s69 + $0x8] sm:$0xff]
    %v135 = vsub.f32 %v131, %v133
    %v136 = vsub.f32 %v132, %v134
    %vm137 = vcmp.eq.f32.partialorder %v129, 0.0
    %vm138 = vcmp.eq.f32.partialorder %v130, 0.0
    %v139 = vsel %vm137, 1, 0
    %v140 = vsel %vm138, 1, 0
    %v141 = vcvt.s32.f32 %v139
    %v142 = vcvt.s32.f32 %v140
    %144 = vset.pattern.permute.xlu0 0
    %145 = vperm.xlu0 %144, %v87
    %v146 = vpop.permute.xlu0 %145
    %v148 = vmul.f32 %v129, %v146
    %v149 = vmul.f32 %v130, %v146
    %v150 = vadd.f32 %v141, %v148
    %v151 = vadd.f32 %v142, %v149
    %v152 = vmax.f32 %v150, 1e-06
    %v153 = vmax.f32 %v151, 1e-06
    %v154 = vlog2.pop %v152
    %v155 = vmul.f32 %v154, 0.6931472
    %v156 = vlog2.pop %v153
    %v157 = vmul.f32 %v156, 0.6931472
    %v158 = vmul.f32 %v135, %v135
    %v159 = vmul.f32 %v136, %v136
    %v160 = vrcp.pop %v152
    %v161 = vmul.f32 %v158, %v160
    %v162 = vrcp.pop %v153
    %v163 = vmul.f32 %v159, %v162
    %v164 = vadd.f32 %v155, %v161
    %v165 = vadd.f32 %v157, %v163
    %v166 = vmul.f32 %v164, 0.5
    %v167 = vmul.f32 %v165, 0.5
    %v168 = vld [vmem:[#allocation5] sm:$0x1]
    %v169 = vadd.f32 %v166, %v167
    %170 = vadd.xlane.f32.xlu0 %v169
    %v171 = vpop.xlane.xlu0 %170
    %v172 = vrot.slane %v171, 4
    %v173 = vadd.f32 %v171, %v172
    %v174 = vrot.slane %v173, 2
    %v175 = vadd.f32 %v173, %v174
    %v176 = vrot.slane %v175, 1
    %v177 = vadd.f32 %v175, %v176
    %s178 = vtos %v177
    %v179 = vstv %s178
    %v180 = vadd.f32 %v168, %v179
    %vm181 = vcmask 0
    %182 = vst.msk [vmem:[#allocation5] sm:$0x1] %vm181, %v180
    // Predicated region
    $region26: #{tpu_custom_call.1} parent=1 // pred_check
      _
    $region27: #{tpu_custom_call.1} parent=1 // pred_check_branch
      %184 = sbr.rel (0) target = $region29
    $region28: #{tpu_custom_call.1} parent=1 // pred_region
      %s185 = sadd.s32 0, 0
      %s187 = ssub.s32 16, 16
      %188 = vsyncadd [#allocation4], %s187
      %s189 = smul.addr %s185, 16
      %s190 = scalar_lea.hbm %s4, %s189
      %s192 = sshll.u32 [#allocation5], 4
      %s193 = int_to_ptr.vmem [resolvable:$true] %s192
      %195 = dma.vmem_to_hbm [thread:$0]  %s193, 16, %s190, [#allocation4]
    $region29: #{tpu_custom_call.1} parent=1 // pred_fallthru
      _
    // Predicated region
    $region30: #{tpu_custom_call.1} parent=1 // pred_check
      _
    $region31: #{tpu_custom_call.1} parent=1 // pred_check_branch
      %197 = sbr.rel (0) target = $region33
    $region32: #{tpu_custom_call.1} parent=1 // pred_region
      %198 = dma.done [#allocation4], 16
    $region33: #{tpu_custom_call.1} parent=1 // pred_fallthru
      _
    %199 = vsyncpa [#allocation3], 1
    %200 = vsyncpa [#allocation4], 1

</llo_original>
